<compile_context>
chip_gen: v5e
topology: v5e:2x2
jax: 0.10.0
libtpu: 0.0.40
codegen_flags: <defaults>
</compile_context>

<pallas_src>
import functools

import jax
import jax.numpy as jnp
import numpy as np
from jax.experimental import pallas as pl
from jax.experimental.pallas import tpu as pltpu

_VMEM_LIMIT_BYTES = 32 * 1024 * 1024   # safe on v5e/v6e/v7x (>= default everywhere)
_UNIT_BUDGET_BYTES = 1 << 20           # target bytes for one (nb, c_tile, HW) block


# ------------------------------ kernels -------------------------------------


def _split_shuffle_kernel(x1_lo_ref, x2_lo_ref, x1_hi_ref, x2_hi_ref,
                          o1_ref, o2_ref):
    # inputs:  (nb, 1, c_tile, HW) VMEM tiles (the size-1 axis selects lo/hi half
    #          via the BlockSpec index_map; dropping it is a free reshape).
    # outputs: (nb, c_tile, 2*HW) — lane-contiguous halves, unmasked stores when
    #          HW is a multiple of 128.
    nb, _, ct, hw = x1_lo_ref.shape
    o1_ref[:, :, :hw] = x1_lo_ref[...].reshape(nb, ct, hw)
    o1_ref[:, :, hw:] = x2_lo_ref[...].reshape(nb, ct, hw)
    o2_ref[:, :, :hw] = x1_hi_ref[...].reshape(nb, ct, hw)
    o2_ref[:, :, hw:] = x2_hi_ref[...].reshape(nb, ct, hw)


def _full_shuffle_kernel(x1_ref, x2_ref, o_ref):
    # inputs:  (nb, c_tile, HW);  output: (nb, c_tile, 2*HW)
    hw = x1_ref.shape[-1]
    o_ref[:, :, :hw] = x1_ref[...]
    o_ref[:, :, hw:] = x2_ref[...]


# ---------------------------- tiling heuristics ------------------------------


def _choose_channel_tile(c_total, hw, itemsize, unit_budget):
    """Channel tile that divides c_total, is a multiple of 8 (or == c_total so the
    block equals the full array dim), and keeps c_tile*hw*itemsize near budget."""
    row_bytes = hw * itemsize
    if c_total * row_bytes <= unit_budget:
        return c_total
    best = None
    d = 8
    while d < c_total:
        if c_total % d == 0 and d * row_bytes <= unit_budget:
            best = d
        d += 8
    if best is not None:
        return best
    # No aligned divisor fits the budget: smallest aligned divisor, else full.
    d = 8
    while d < c_total:
        if c_total % d == 0:
            return d
        d += 8
    # TODO(synk): add lane (HW) tiling for extreme H*W where even one aligned
    # channel row exceeds the VMEM budget.
    return c_total


def _choose_batch_tile(n, block_elems, itemsize, unit_budget):
    """Fold batch elements into one block while staying within the budget."""
    nb = 1
    for d in range(1, n + 1):
        if n % d == 0 and d * block_elems * itemsize <= unit_budget:
            nb = d
    return nb


# ------------------------------- wrapper -------------------------------------


@functools.partial(jax.jit, static_argnames=("split_shuffle",))
def channel_shuffle(x1, x2, split_shuffle=True):
    """x1, x2: (N, C, H, W), each carrying in_channels // 2 channels (groups=2)."""
    assert x1.shape == x2.shape and x1.dtype == x2.dtype
    N, C, H, W = x1.shape
    HW = H * W
    itemsize = jnp.dtype(x1.dtype).itemsize
    bytes_accessed = 4 * N * C * HW * itemsize  # read x1+x2, write same volume
    cost = pl.CostEstimate(flops=0, transcendentals=0, bytes_accessed=bytes_accessed)

    if split_shuffle:
        assert C % 2 == 0, "split_shuffle=True needs an even per-input channel count"
        half = C // 2
        c_tile = _choose_channel_tile(half, HW, itemsize, _UNIT_BUDGET_BYTES)
        nb = _choose_batch_tile(N, c_tile * HW, itemsize, _UNIT_BUDGET_BYTES)
        grid = (N // nb, half // c_tile)

        # Free row-major regrouping: channel c = h*half + i  ->  axes (h, i).
        x1v = x1.reshape(N, 2, half, HW)
        x2v = x2.reshape(N, 2, half, HW)

        def in_spec(h):
            return pl.BlockSpec((nb, 1, c_tile, HW),
                                lambda n, c, h=h: (n, h, c, 0))

        out_spec = pl.BlockSpec((nb, c_tile, 2 * HW), lambda n, c: (n, c, 0))
        out_shape = jax.ShapeDtypeStruct((N, half, 2 * HW), x1.dtype)

        o1, o2 = pl.pallas_call(
            _split_shuffle_kernel,
            out_shape=(out_shape, out_shape),
            grid_spec=pltpu.PrefetchScalarGridSpec(
                num_scalar_prefetch=0,
                grid=grid,
                in_specs=[in_spec(0), in_spec(0), in_spec(1), in_spec(1)],
                out_specs=[out_spec, out_spec],
            ),
            compiler_params=pltpu.CompilerParams(
                dimension_semantics=("parallel", "parallel"),
                vmem_limit_bytes=_VMEM_LIMIT_BYTES,
            ),
            cost_estimate=cost,
        )(x1v, x2v, x1v, x2v)

        # (N, half, 2*HW) row-major == interleaved (N, C, H, W): channel 2i is
        # x1[i], channel 2i+1 is x2[i].
        return o1.reshape(N, C, H, W), o2.reshape(N, C, H, W)

    # ---- split_shuffle=False: single fused output, no concat pass ----
    c_tile = _choose_channel_tile(C, HW, itemsize, _UNIT_BUDGET_BYTES)
    nb = _choose_batch_tile(N, c_tile * HW, itemsize, _UNIT_BUDGET_BYTES)
    grid = (N // nb, C // c_tile)

    x1f = x1.reshape(N, C, HW)
    x2f = x2.reshape(N, C, HW)
    in_spec = pl.BlockSpec((nb, c_tile, HW), lambda n, c: (n, c, 0))
    out_spec = pl.BlockSpec((nb, c_tile, 2 * HW), lambda n, c: (n, c, 0))

    o = pl.pallas_call(
        _full_shuffle_kernel,
        out_shape=jax.ShapeDtypeStruct((N, C, 2 * HW), x1.dtype),
        grid_spec=pltpu.PrefetchScalarGridSpec(
            num_scalar_prefetch=0,
            grid=grid,
            in_specs=[in_spec, in_spec],
            out_specs=out_spec,
        ),
        compiler_params=pltpu.CompilerParams(
            dimension_semantics=("parallel", "parallel"),
            vmem_limit_bytes=_VMEM_LIMIT_BYTES,
        ),
        cost_estimate=cost,
    )(x1f, x2f)

    # (N, C, 2*HW) row-major == interleaved (N, 2C, H, W).
    return o.reshape(N, 2 * C, H, W)


# ------------------------------ reference ------------------------------------


def _reference_numpy(x1, x2, split_shuffle=True):
    """Direct port of the torch reference (concat + index_select)."""
    in_channels = x1.shape[1] + x2.shape[1]
    groups = 2
    group_len = in_channels // groups
    out_channels = (
        np.arange(in_channels).reshape(groups, group_len).transpose(1, 0).flatten()
    )
    x = np.concatenate([x1, x2], axis=1)
    if split_shuffle:
        return x[:, out_channels[:group_len]], x[:, out_channels[group_len:]]
    return x[:, out_channels]


if __name__ == "__main__":
    key = jax.random.PRNGKey(0)
    k1, k2 = jax.random.split(key)

    # ChannelShuffle(in_channels=8, groups=2): each input has 4 channels.
    N, C, H, W = 2, 4, 16, 16
    x1 = jax.random.normal(k1, (N, C, H, W), dtype=jnp.float32)
    x2 = jax.random.normal(k2, (N, C, H, W), dtype=jnp.float32)

    # split_shuffle=True (module default)
    out1, out2 = channel_shuffle(x1, x2, split_shuffle=True)
    out1 = jax.block_until_ready(out1)
    out2 = jax.block_until_ready(out2)
    ref1, ref2 = _reference_numpy(np.asarray(x1), np.asarray(x2), split_shuffle=True)
    np.testing.assert_array_equal(np.asarray(out1), ref1)
    np.testing.assert_array_equal(np.asarray(out2), ref2)

    # split_shuffle=False (full shuffle, fused single output)
    full = jax.block_until_ready(channel_shuffle(x1, x2, split_shuffle=False))
    ref_full = _reference_numpy(np.asarray(x1), np.asarray(x2), split_shuffle=False)
    np.testing.assert_array_equal(np.asarray(full), ref_full)

    print("KERNEL_OK")
</pallas_src>

<mosaic_0001>
module attributes {stable_mosaic.version = 11 : i64} {
  func.func @_split_shuffle_kernel(%arg0: i32, %arg1: i32, %arg2: memref<2x1x2x256xf32, #tpu.memory_space<vmem>>, %arg3: memref<2x1x2x256xf32, #tpu.memory_space<vmem>>, %arg4: memref<2x1x2x256xf32, #tpu.memory_space<vmem>>, %arg5: memref<2x1x2x256xf32, #tpu.memory_space<vmem>>, %arg6: memref<2x2x512xf32, #tpu.memory_space<vmem>>, %arg7: memref<2x2x512xf32, #tpu.memory_space<vmem>>) attributes {dimension_semantics = [#tpu.dimension_semantics<parallel>, #tpu.dimension_semantics<parallel>], iteration_bounds = array<i64: 1, 1>, scalar_prefetch = 0 : i64, scratch_operands = 0 : i64, tpu.core_type = #tpu.core_type<tc>, window_params = [{transform_indices = @transform_0, window_bounds = array<i64: 2, 1, 2, 256>}, {transform_indices = @transform_1, window_bounds = array<i64: 2, 1, 2, 256>}, {transform_indices = @transform_2, window_bounds = array<i64: 2, 1, 2, 256>}, {transform_indices = @transform_3, window_bounds = array<i64: 2, 1, 2, 256>}, {transform_indices = @transform_4, window_bounds = array<i64: 2, 2, 512>}, {transform_indices = @transform_5, window_bounds = array<i64: 2, 2, 512>}]} {
    %c0 = arith.constant 0 : index
    %c0_0 = arith.constant 0 : index
    %c0_1 = arith.constant 0 : index
    %c0_2 = arith.constant 0 : index
    %0 = vector.load %arg2[%c0, %c0_0, %c0_1, %c0_2] : memref<2x1x2x256xf32, #tpu.memory_space<vmem>>, vector<2x1x2x256xf32>
    %1 = vector.shape_cast %0 : vector<2x1x2x256xf32> to vector<2x2x256xf32>
    %c0_3 = arith.constant 0 : index
    %c0_4 = arith.constant 0 : index
    %c0_5 = arith.constant 0 : index
    %2 = vector.load %arg6[%c0_3, %c0_4, %c0_5] : memref<2x2x512xf32, #tpu.memory_space<vmem>>, vector<2x2x256xf32>
    tpu.vector_store %arg6[%c0_3, %c0_4, %c0_5], %1 {strides = array<i32>} : memref<2x2x512xf32, #tpu.memory_space<vmem>>, vector<2x2x256xf32>,
    %c0_6 = arith.constant 0 : index
    %c0_7 = arith.constant 0 : index
    %c0_8 = arith.constant 0 : index
    %c0_9 = arith.constant 0 : index
    %3 = vector.load %arg3[%c0_6, %c0_7, %c0_8, %c0_9] : memref<2x1x2x256xf32, #tpu.memory_space<vmem>>, vector<2x1x2x256xf32>
    %4 = vector.shape_cast %3 : vector<2x1x2x256xf32> to vector<2x2x256xf32>
    %c0_10 = arith.constant 0 : index
    %c0_11 = arith.constant 0 : index
    %c256 = arith.constant 256 : index
    %5 = vector.load %arg6[%c0_10, %c0_11, %c256] : memref<2x2x512xf32, #tpu.memory_space<vmem>>, vector<2x2x256xf32>
    tpu.vector_store %arg6[%c0_10, %c0_11, %c256], %4 {strides = array<i32>} : memref<2x2x512xf32, #tpu.memory_space<vmem>>, vector<2x2x256xf32>,
    %c0_12 = arith.constant 0 : index
    %c0_13 = arith.constant 0 : index
    %c0_14 = arith.constant 0 : index
    %c0_15 = arith.constant 0 : index
    %6 = vector.load %arg4[%c0_12, %c0_13, %c0_14, %c0_15] : memref<2x1x2x256xf32, #tpu.memory_space<vmem>>, vector<2x1x2x256xf32>
    %7 = vector.shape_cast %6 : vector<2x1x2x256xf32> to vector<2x2x256xf32>
    %c0_16 = arith.constant 0 : index
    %c0_17 = arith.constant 0 : index
    %c0_18 = arith.constant 0 : index
    %8 = vector.load %arg7[%c0_16, %c0_17, %c0_18] : memref<2x2x512xf32, #tpu.memory_space<vmem>>, vector<2x2x256xf32>
    tpu.vector_store %arg7[%c0_16, %c0_17, %c0_18], %7 {strides = array<i32>} : memref<2x2x512xf32, #tpu.memory_space<vmem>>, vector<2x2x256xf32>,
    %c0_19 = arith.constant 0 : index
    %c0_20 = arith.constant 0 : index
    %c0_21 = arith.constant 0 : index
    %c0_22 = arith.constant 0 : index
    %9 = vector.load %arg5[%c0_19, %c0_20, %c0_21, %c0_22] : memref<2x1x2x256xf32, #tpu.memory_space<vmem>>, vector<2x1x2x256xf32>
    %10 = vector.shape_cast %9 : vector<2x1x2x256xf32> to vector<2x2x256xf32>
    %c0_23 = arith.constant 0 : index
    %c0_24 = arith.constant 0 : index
    %c256_25 = arith.constant 256 : index
    %11 = vector.load %arg7[%c0_23, %c0_24, %c256_25] : memref<2x2x512xf32, #tpu.memory_space<vmem>>, vector<2x2x256xf32>
    tpu.vector_store %arg7[%c0_23, %c0_24, %c256_25], %10 {strides = array<i32>} : memref<2x2x512xf32, #tpu.memory_space<vmem>>, vector<2x2x256xf32>,
    return
  }
  func.func @transform_0(%arg0: i32, %arg1: i32) -> (i32, i32, i32, i32) {
    %c0_i32 = arith.constant 0 : i32
    %c0_i32_0 = arith.constant 0 : i32
    %c0_i32_1 = arith.constant 0 : i32
    return %arg0, %c0_i32, %arg1, %c0_i32_0 : i32, i32, i32, i32
  }
  func.func @transform_1(%arg0: i32, %arg1: i32) -> (i32, i32, i32, i32) {
    %c0_i32 = arith.constant 0 : i32
    %c0_i32_0 = arith.constant 0 : i32
    %c0_i32_1 = arith.constant 0 : i32
    return %arg0, %c0_i32, %arg1, %c0_i32_0 : i32, i32, i32, i32
  }
  func.func @transform_2(%arg0: i32, %arg1: i32) -> (i32, i32, i32, i32) {
    %c1_i32 = arith.constant 1 : i32
    %c0_i32 = arith.constant 0 : i32
    %c0_i32_0 = arith.constant 0 : i32
    return %arg0, %c1_i32, %arg1, %c0_i32 : i32, i32, i32, i32
  }
  func.func @transform_3(%arg0: i32, %arg1: i32) -> (i32, i32, i32, i32) {
    %c1_i32 = arith.constant 1 : i32
    %c0_i32 = arith.constant 0 : i32
    %c0_i32_0 = arith.constant 0 : i32
    return %arg0, %c1_i32, %arg1, %c0_i32 : i32, i32, i32, i32
  }
  func.func @transform_4(%arg0: i32, %arg1: i32) -> (i32, i32, i32) {
    %c0_i32 = arith.constant 0 : i32
    %c0_i32_0 = arith.constant 0 : i32
    return %arg0, %arg1, %c0_i32 : i32, i32, i32
  }
  func.func @transform_5(%arg0: i32, %arg1: i32) -> (i32, i32, i32) {
    %c0_i32 = arith.constant 0 : i32
    %c0_i32_0 = arith.constant 0 : i32
    return %arg0, %arg1, %c0_i32 : i32, i32, i32
  }
}

</mosaic_0001>

<llo_original>
// kernel: channel_shuffle.1
$region0: #{channel_shuffle.1}
  #allocation0 [shape = 'u32[]', space=smem, size = 0x4, offset = 0x4, fixed_abs, tag = 'smem constant byte address 0x4 - core index']
  #allocation1 [shape = 'u32[72,128]{1,0:T(1,128)}', space=vmem, size = 0x9000, scoped, tag = 'internal scratch']
  %s0 = inlined_call_operand.vmem [shape: f32[2,2,2,256], index: 0, kind: input, shape index: {}, may-alias: {0,2}]
  %s1 = inlined_call_operand.vmem [shape: f32[2,2,2,256], index: 1, kind: input, shape index: {}, may-alias: {1,3}]
  %s2 = inlined_call_operand.vmem [shape: f32[2,2,2,256], index: 2, kind: input, shape index: {}, may-alias: {0,2}]
  %s3 = inlined_call_operand.vmem [shape: f32[2,2,2,256], index: 3, kind: input, shape index: {}, may-alias: {1,3}]
  %s4 = inlined_call_operand.vmem [shape: f32[2,2,512], index: 4, kind: output, shape index: {0}]
  %s5 = inlined_call_operand.vmem [shape: f32[2,2,512], index: 5, kind: output, shape index: {1}]
  %6 = xla_tuple %s4, %s5
  %s7 = sld [smem:[#allocation0]]
  $region198: #{channel_shuffle.1} parent=0
    _
  %s9 = ssub.s32 1, %s7
  %s10 = scalar_select 0, %s9, %s7
  $region1: #{channel_shuffle.1} parent=0
    #allocation2 [shape = 'u8[4096]{0}', space=vmem, size = 0x1000, scoped, tag = 'input window, operand 0, single buffered']
    #allocation3 [shape = 'u8[4096]{0}', space=vmem, size = 0x1000, scoped, tag = 'input window, operand 1, single buffered']
    #allocation4 [shape = 'u8[4096]{0}', space=vmem, size = 0x1000, scoped, tag = 'input window, operand 2, single buffered']
    #allocation5 [shape = 'u8[4096]{0}', space=vmem, size = 0x1000, scoped, tag = 'input window, operand 3, single buffered']
    // Predicated region
    $region2: #{channel_shuffle.1} parent=1 // pred_check
      _
    $region3: #{channel_shuffle.1} parent=1 // pred_check_branch
      %12 = sbr.rel (0) target = $region5
    $region4: #{channel_shuffle.1} parent=1 // pred_region
      // Predicated region
      $region6: #{channel_shuffle.1} parent=4 // pred_check
        _
      $region7: #{channel_shuffle.1} parent=4 // pred_check_branch
        %14 = sbr.rel (0) target = $region9
      $region8: #{channel_shuffle.1} parent=4 // pred_region
        // Predicated region
        $region10: #{channel_shuffle.1} parent=8 // pred_check
          _
        $region11: #{channel_shuffle.1} parent=8 // pred_check_branch
          %16 = sbr.rel target = $region13
        $region12: #{channel_shuffle.1} parent=8 // pred_region
          // Predicated region
          $region25: #{channel_shuffle.1} parent=12 // pred_check
            _
          $region26: #{channel_shuffle.1} parent=12 // pred_check_branch
            %34 = sbr.rel (0) target = $region28
          $region27: #{channel_shuffle.1} parent=12 // pred_region
            loop: start=0, step=1, limit=1
            $region29: #{channel_shuffle.1} parent=27 // loop_pre_header
              _
            $region30: #{channel_shuffle.1} parent=27 // loop_header
              %s36 = sphi 0, %s40
              %p37 = scmp.ge.s32.totalorder %s36, 1
              %s41 = sphi %s0, %s0
              %s42 = sphi [#allocation2], [#allocation2]
            $region31: #{channel_shuffle.1} parent=27 // loop_header_branch
              %39 = sbr.rel (%p37) target = $region35
            $region32: #{channel_shuffle.1} parent=27 // loop_body
              _
            $region33: #{channel_shuffle.1} parent=27 // loop_footer
              %s40 = sadd.s32 1, %s36
            $region34: #{channel_shuffle.1} parent=27 // loop_footer_branch
              %35 = sbr.rel target = $region30
            $region35: #{channel_shuffle.1} parent=27 // loop_exit
              _
            %s44 = ssub.s32 16, 1
            loop: start=0, step=1, limit=1
            $region36: #{channel_shuffle.1} parent=27 // loop_pre_header
              _
            $region37: #{channel_shuffle.1} parent=27 // loop_header
              %s46 = sphi 0, %s50
              %p47 = scmp.ge.s32.totalorder %s46, 1
              %s51 = sphi %s0, %s0
              %s52 = sphi [#allocation2], [#allocation2]
            $region38: #{channel_shuffle.1} parent=27 // loop_header_branch
              %49 = sbr.rel (%p47) target = $region42
            $region39: #{channel_shuffle.1} parent=27 // loop_body
              %v53 = vld [vmem:[%s51] sm:%s44]
              %54 = vst [vmem:[%s52] sm:%s44] %v53
              %v55 = vld [vmem:[%s51 + $0x8] sm:%s44]
              %56 = vst [vmem:[%s52 + $0x4] sm:%s44] %v55
            $region40: #{channel_shuffle.1} parent=27 // loop_footer
              %s50 = sadd.s32 1, %s46
            $region41: #{channel_shuffle.1} parent=27 // loop_footer_branch
              %45 = sbr.rel target = $region37
            $region42: #{channel_shuffle.1} parent=27 // loop_exit
              _
          $region28: #{channel_shuffle.1} parent=12 // pred_fallthru
            _
        $region13: #{channel_shuffle.1} parent=8 // pred_fallthru
          _
        // Predicated region
        $region14: #{channel_shuffle.1} parent=8 // pred_check
          _
        $region15: #{channel_shuffle.1} parent=8 // pred_check_branch
          %18 = sbr.rel (0) target = $region17
        $region16: #{channel_shuffle.1} parent=8 // pred_region
          %s20 = ssub.s32 16, 1
          loop: start=0, step=1, limit=1
          $region18: #{channel_shuffle.1} parent=16 // loop_pre_header
            _
          $region19: #{channel_shuffle.1} parent=16 // loop_header
            %s22 = sphi 0, %s26
            %p23 = scmp.ge.s32.totalorder %s22, 1
            %s27 = sphi %s0, %s0
            %s28 = sphi [#allocation2], [#allocation2]
          $region20: #{channel_shuffle.1} parent=16 // loop_header_branch
            %25 = sbr.rel (%p23) target = $region24
          $region21: #{channel_shuffle.1} parent=16 // loop_body
            %v29 = vld [vmem:[%s27] sm:%s20]
            %30 = vst [vmem:[%s28] sm:%s20] %v29
            %v31 = vld [vmem:[%s27 + $0x8] sm:%s20]
            %32 = vst [vmem:[%s28 + $0x4] sm:%s20] %v31
          $region22: #{channel_shuffle.1} parent=16 // loop_footer
            %s26 = sadd.s32 1, %s22
          $region23: #{channel_shuffle.1} parent=16 // loop_footer_branch
            %21 = sbr.rel target = $region19
          $region24: #{channel_shuffle.1} parent=16 // loop_exit
            _
        $region17: #{channel_shuffle.1} parent=8 // pred_fallthru
          _
      $region9: #{channel_shuffle.1} parent=4 // pred_fallthru
        _
      %57 = vnop
    $region5: #{channel_shuffle.1} parent=1 // pred_fallthru
      _
    // Predicated region
    $region43: #{channel_shuffle.1} parent=1 // pred_check
      _
    $region44: #{channel_shuffle.1} parent=1 // pred_check_branch
      %59 = sbr.rel (0) target = $region46
    $region45: #{channel_shuffle.1} parent=1 // pred_region
      // Predicated region
      $region47: #{channel_shuffle.1} parent=45 // pred_check
        _
      $region48: #{channel_shuffle.1} parent=45 // pred_check_branch
        %61 = sbr.rel (0) target = $region50
      $region49: #{channel_shuffle.1} parent=45 // pred_region
        // Predicated region
        $region51: #{channel_shuffle.1} parent=49 // pred_check
          _
        $region52: #{channel_shuffle.1} parent=49 // pred_check_branch
          %63 = sbr.rel target = $region54
        $region53: #{channel_shuffle.1} parent=49 // pred_region
          // Predicated region
          $region66: #{channel_shuffle.1} parent=53 // pred_check
            _
          $region67: #{channel_shuffle.1} parent=53 // pred_check_branch
            %81 = sbr.rel (0) target = $region69
          $region68: #{channel_shuffle.1} parent=53 // pred_region
            loop: start=0, step=1, limit=1
            $region70: #{channel_shuffle.1} parent=68 // loop_pre_header
              _
            $region71: #{channel_shuffle.1} parent=68 // loop_header
              %s83 = sphi 0, %s87
              %p84 = scmp.ge.s32.totalorder %s83, 1
              %s88 = sphi %s1, %s1
              %s89 = sphi [#allocation3], [#allocation3]
            $region72: #{channel_shuffle.1} parent=68 // loop_header_branch
              %86 = sbr.rel (%p84) target = $region76
            $region73: #{channel_shuffle.1} parent=68 // loop_body
              _
            $region74: #{channel_shuffle.1} parent=68 // loop_footer
              %s87 = sadd.s32 1, %s83
            $region75: #{channel_shuffle.1} parent=68 // loop_footer_branch
              %82 = sbr.rel target = $region71
            $region76: #{channel_shuffle.1} parent=68 // loop_exit
              _
            %s91 = ssub.s32 16, 1
            loop: start=0, step=1, limit=1
            $region77: #{channel_shuffle.1} parent=68 // loop_pre_header
              _
            $region78: #{channel_shuffle.1} parent=68 // loop_header
              %s93 = sphi 0, %s97
              %p94 = scmp.ge.s32.totalorder %s93, 1
              %s98 = sphi %s1, %s1
              %s99 = sphi [#allocation3], [#allocation3]
            $region79: #{channel_shuffle.1} parent=68 // loop_header_branch
              %96 = sbr.rel (%p94) target = $region83
            $region80: #{channel_shuffle.1} parent=68 // loop_body
              %v100 = vld [vmem:[%s98] sm:%s91]
              %101 = vst [vmem:[%s99] sm:%s91] %v100
              %v102 = vld [vmem:[%s98 + $0x8] sm:%s91]
              %103 = vst [vmem:[%s99 + $0x4] sm:%s91] %v102
            $region81: #{channel_shuffle.1} parent=68 // loop_footer
              %s97 = sadd.s32 1, %s93
            $region82: #{channel_shuffle.1} parent=68 // loop_footer_branch
              %92 = sbr.rel target = $region78
            $region83: #{channel_shuffle.1} parent=68 // loop_exit
              _
          $region69: #{channel_shuffle.1} parent=53 // pred_fallthru
            _
        $region54: #{channel_shuffle.1} parent=49 // pred_fallthru
          _
        // Predicated region
        $region55: #{channel_shuffle.1} parent=49 // pred_check
          _
        $region56: #{channel_shuffle.1} parent=49 // pred_check_branch
          %65 = sbr.rel (0) target = $region58
        $region57: #{channel_shuffle.1} parent=49 // pred_region
          %s67 = ssub.s32 16, 1
          loop: start=0, step=1, limit=1
          $region59: #{channel_shuffle.1} parent=57 // loop_pre_header
            _
          $region60: #{channel_shuffle.1} parent=57 // loop_header
            %s69 = sphi 0, %s73
            %p70 = scmp.ge.s32.totalorder %s69, 1
            %s74 = sphi %s1, %s1
            %s75 = sphi [#allocation3], [#allocation3]
          $region61: #{channel_shuffle.1} parent=57 // loop_header_branch
            %72 = sbr.rel (%p70) target = $region65
          $region62: #{channel_shuffle.1} parent=57 // loop_body
            %v76 = vld [vmem:[%s74] sm:%s67]
            %77 = vst [vmem:[%s75] sm:%s67] %v76
            %v78 = vld [vmem:[%s74 + $0x8] sm:%s67]
            %79 = vst [vmem:[%s75 + $0x4] sm:%s67] %v78
          $region63: #{channel_shuffle.1} parent=57 // loop_footer
            %s73 = sadd.s32 1, %s69
          $region64: #{channel_shuffle.1} parent=57 // loop_footer_branch
            %68 = sbr.rel target = $region60
          $region65: #{channel_shuffle.1} parent=57 // loop_exit
            _
        $region58: #{channel_shuffle.1} parent=49 // pred_fallthru
          _
      $region50: #{channel_shuffle.1} parent=45 // pred_fallthru
        _
      %104 = vnop
    $region46: #{channel_shuffle.1} parent=1 // pred_fallthru
      _
    // Predicated region
    $region84: #{channel_shuffle.1} parent=1 // pred_check
      _
    $region85: #{channel_shuffle.1} parent=1 // pred_check_branch
      %106 = sbr.rel (0) target = $region87
    $region86: #{channel_shuffle.1} parent=1 // pred_region
      %s107 = scalar_lea.vmem %s2, 4
      // Predicated region
      $region88: #{channel_shuffle.1} parent=86 // pred_check
        _
      $region89: #{channel_shuffle.1} parent=86 // pred_check_branch
        %109 = sbr.rel (0) target = $region91
      $region90: #{channel_shuffle.1} parent=86 // pred_region
        // Predicated region
        $region92: #{channel_shuffle.1} parent=90 // pred_check
          _
        $region93: #{channel_shuffle.1} parent=90 // pred_check_branch
          %111 = sbr.rel target = $region95
        $region94: #{channel_shuffle.1} parent=90 // pred_region
          // Predicated region
          $region107: #{channel_shuffle.1} parent=94 // pred_check
            _
          $region108: #{channel_shuffle.1} parent=94 // pred_check_branch
            %129 = sbr.rel (0) target = $region110
          $region109: #{channel_shuffle.1} parent=94 // pred_region
            loop: start=0, step=1, limit=1
            $region111: #{channel_shuffle.1} parent=109 // loop_pre_header
              _
            $region112: #{channel_shuffle.1} parent=109 // loop_header
              %s131 = sphi 0, %s135
              %p132 = scmp.ge.s32.totalorder %s131, 1
              %s136 = sphi %s107, %s107
              %s137 = sphi [#allocation4], [#allocation4]
            $region113: #{channel_shuffle.1} parent=109 // loop_header_branch
              %134 = sbr.rel (%p132) target = $region117
            $region114: #{channel_shuffle.1} parent=109 // loop_body
              _
            $region115: #{channel_shuffle.1} parent=109 // loop_footer
              %s135 = sadd.s32 1, %s131
            $region116: #{channel_shuffle.1} parent=109 // loop_footer_branch
              %130 = sbr.rel target = $region112
            $region117: #{channel_shuffle.1} parent=109 // loop_exit
              _
            %s139 = ssub.s32 16, 1
            loop: start=0, step=1, limit=1
            $region118: #{channel_shuffle.1} parent=109 // loop_pre_header
              _
            $region119: #{channel_shuffle.1} parent=109 // loop_header
              %s141 = sphi 0, %s145
              %p142 = scmp.ge.s32.totalorder %s141, 1
              %s146 = sphi %s107, %s107
              %s147 = sphi [#allocation4], [#allocation4]
            $region120: #{channel_shuffle.1} parent=109 // loop_header_branch
              %144 = sbr.rel (%p142) target = $region124
            $region121: #{channel_shuffle.1} parent=109 // loop_body
              %v148 = vld [vmem:[%s146] sm:%s139]
              %149 = vst [vmem:[%s147] sm:%s139] %v148
              %v150 = vld [vmem:[%s146 + $0x8] sm:%s139]
              %151 = vst [vmem:[%s147 + $0x4] sm:%s139] %v150
            $region122: #{channel_shuffle.1} parent=109 // loop_footer
              %s145 = sadd.s32 1, %s141
            $region123: #{channel_shuffle.1} parent=109 // loop_footer_branch
              %140 = sbr.rel target = $region119
            $region124: #{channel_shuffle.1} parent=109 // loop_exit
              _
          $region110: #{channel_shuffle.1} parent=94 // pred_fallthru
            _
        $region95: #{channel_shuffle.1} parent=90 // pred_fallthru
          _
        // Predicated region
        $region96: #{channel_shuffle.1} parent=90 // pred_check
          _
        $region97: #{channel_shuffle.1} parent=90 // pred_check_branch
          %113 = sbr.rel (0) target = $region99
        $region98: #{channel_shuffle.1} parent=90 // pred_region
          %s115 = ssub.s32 16, 1
          loop: start=0, step=1, limit=1
          $region100: #{channel_shuffle.1} parent=98 // loop_pre_header
            _
          $region101: #{channel_shuffle.1} parent=98 // loop_header
            %s117 = sphi 0, %s121
            %p118 = scmp.ge.s32.totalorder %s117, 1
            %s122 = sphi %s107, %s107
            %s123 = sphi [#allocation4], [#allocation4]
          $region102: #{channel_shuffle.1} parent=98 // loop_header_branch
            %120 = sbr.rel (%p118) target = $region106
          $region103: #{channel_shuffle.1} parent=98 // loop_body
            %v124 = vld [vmem:[%s122] sm:%s115]
            %125 = vst [vmem:[%s123] sm:%s115] %v124
            %v126 = vld [vmem:[%s122 + $0x8] sm:%s115]
            %127 = vst [vmem:[%s123 + $0x4] sm:%s115] %v126
          $region104: #{channel_shuffle.1} parent=98 // loop_footer
            %s121 = sadd.s32 1, %s117
          $region105: #{channel_shuffle.1} parent=98 // loop_footer_branch
            %116 = sbr.rel target = $region101
          $region106: #{channel_shuffle.1} parent=98 // loop_exit
            _
        $region99: #{channel_shuffle.1} parent=90 // pred_fallthru
          _
      $region91: #{channel_shuffle.1} parent=86 // pred_fallthru
        _
      %152 = vnop
    $region87: #{channel_shuffle.1} parent=1 // pred_fallthru
      _
    // Predicated region
    $region125: #{channel_shuffle.1} parent=1 // pred_check
      _
    $region126: #{channel_shuffle.1} parent=1 // pred_check_branch
      %154 = sbr.rel (0) target = $region128
    $region127: #{channel_shuffle.1} parent=1 // pred_region
      %s155 = scalar_lea.vmem %s3, 4
      // Predicated region
      $region129: #{channel_shuffle.1} parent=127 // pred_check
        _
      $region130: #{channel_shuffle.1} parent=127 // pred_check_branch
        %157 = sbr.rel (0) target = $region132
      $region131: #{channel_shuffle.1} parent=127 // pred_region
        // Predicated region
        $region133: #{channel_shuffle.1} parent=131 // pred_check
          _
        $region134: #{channel_shuffle.1} parent=131 // pred_check_branch
          %159 = sbr.rel target = $region136
        $region135: #{channel_shuffle.1} parent=131 // pred_region
          // Predicated region
          $region148: #{channel_shuffle.1} parent=135 // pred_check
            _
          $region149: #{channel_shuffle.1} parent=135 // pred_check_branch
            %177 = sbr.rel (0) target = $region151
          $region150: #{channel_shuffle.1} parent=135 // pred_region
            loop: start=0, step=1, limit=1
            $region152: #{channel_shuffle.1} parent=150 // loop_pre_header
              _
            $region153: #{channel_shuffle.1} parent=150 // loop_header
              %s179 = sphi 0, %s183
              %p180 = scmp.ge.s32.totalorder %s179, 1
              %s184 = sphi %s155, %s155
              %s185 = sphi [#allocation5], [#allocation5]
            $region154: #{channel_shuffle.1} parent=150 // loop_header_branch
              %182 = sbr.rel (%p180) target = $region158
            $region155: #{channel_shuffle.1} parent=150 // loop_body
              _
            $region156: #{channel_shuffle.1} parent=150 // loop_footer
              %s183 = sadd.s32 1, %s179
            $region157: #{channel_shuffle.1} parent=150 // loop_footer_branch
              %178 = sbr.rel target = $region153
            $region158: #{channel_shuffle.1} parent=150 // loop_exit
              _
            %s187 = ssub.s32 16, 1
            loop: start=0, step=1, limit=1
            $region159: #{channel_shuffle.1} parent=150 // loop_pre_header
              _
            $region160: #{channel_shuffle.1} parent=150 // loop_header
              %s189 = sphi 0, %s193
              %p190 = scmp.ge.s32.totalorder %s189, 1
              %s194 = sphi %s155, %s155
              %s195 = sphi [#allocation5], [#allocation5]
            $region161: #{channel_shuffle.1} parent=150 // loop_header_branch
              %192 = sbr.rel (%p190) target = $region165
            $region162: #{channel_shuffle.1} parent=150 // loop_body
              %v196 = vld [vmem:[%s194] sm:%s187]
              %197 = vst [vmem:[%s195] sm:%s187] %v196
              %v198 = vld [vmem:[%s194 + $0x8] sm:%s187]
              %199 = vst [vmem:[%s195 + $0x4] sm:%s187] %v198
            $region163: #{channel_shuffle.1} parent=150 // loop_footer
              %s193 = sadd.s32 1, %s189
            $region164: #{channel_shuffle.1} parent=150 // loop_footer_branch
              %188 = sbr.rel target = $region160
            $region165: #{channel_shuffle.1} parent=150 // loop_exit
              _
          $region151: #{channel_shuffle.1} parent=135 // pred_fallthru
            _
        $region136: #{channel_shuffle.1} parent=131 // pred_fallthru
          _
        // Predicated region
        $region137: #{channel_shuffle.1} parent=131 // pred_check
          _
        $region138: #{channel_shuffle.1} parent=131 // pred_check_branch
          %161 = sbr.rel (0) target = $region140
        $region139: #{channel_shuffle.1} parent=131 // pred_region
          %s163 = ssub.s32 16, 1
          loop: start=0, step=1, limit=1
          $region141: #{channel_shuffle.1} parent=139 // loop_pre_header
            _
          $region142: #{channel_shuffle.1} parent=139 // loop_header
            %s165 = sphi 0, %s169
            %p166 = scmp.ge.s32.totalorder %s165, 1
            %s170 = sphi %s155, %s155
            %s171 = sphi [#allocation5], [#allocation5]
          $region143: #{channel_shuffle.1} parent=139 // loop_header_branch
            %168 = sbr.rel (%p166) target = $region147
          $region144: #{channel_shuffle.1} parent=139 // loop_body
            %v172 = vld [vmem:[%s170] sm:%s163]
            %173 = vst [vmem:[%s171] sm:%s163] %v172
            %v174 = vld [vmem:[%s170 + $0x8] sm:%s163]
            %175 = vst [vmem:[%s171 + $0x4] sm:%s163] %v174
          $region145: #{channel_shuffle.1} parent=139 // loop_footer
            %s169 = sadd.s32 1, %s165
          $region146: #{channel_shuffle.1} parent=139 // loop_footer_branch
            %164 = sbr.rel target = $region142
          $region147: #{channel_shuffle.1} parent=139 // loop_exit
            _
        $region140: #{channel_shuffle.1} parent=131 // pred_fallthru
          _
      $region132: #{channel_shuffle.1} parent=127 // pred_fallthru
        _
      %200 = vnop
    $region128: #{channel_shuffle.1} parent=1 // pred_fallthru
      _
    // Predicated region
    $region166: #{channel_shuffle.1} parent=1 // pred_check
      _
    $region167: #{channel_shuffle.1} parent=1 // pred_check_branch
      %202 = sbr.rel (0) target = $region169
    $region168: #{channel_shuffle.1} parent=1 // pred_region
      _
    $region169: #{channel_shuffle.1} parent=1 // pred_fallthru
      _
    // Predicated region
    $region170: #{channel_shuffle.1} parent=1 // pred_check
      _
    $region171: #{channel_shuffle.1} parent=1 // pred_check_branch
      %204 = sbr.rel (0) target = $region173
    $region172: #{channel_shuffle.1} parent=1 // pred_region
      _
    $region173: #{channel_shuffle.1} parent=1 // pred_fallthru
      _
    // Predicated region
    $region174: #{channel_shuffle.1} parent=1 // pred_check
      _
    $region175: #{channel_shuffle.1} parent=1 // pred_check_branch
      %206 = sbr.rel (0) target = $region177
    $region176: #{channel_shuffle.1} parent=1 // pred_region
      _
    $region177: #{channel_shuffle.1} parent=1 // pred_fallthru
      _
    // Predicated region
    $region178: #{channel_shuffle.1} parent=1 // pred_check
      _
    $region179: #{channel_shuffle.1} parent=1 // pred_check_branch
      %208 = sbr.rel (0) target = $region181
    $region180: #{channel_shuffle.1} parent=1 // pred_region
      _
    $region181: #{channel_shuffle.1} parent=1 // pred_fallthru
      _
    %v209 = vld [vmem:[#allocation2] sm:$0xf]
    %v210 = vld [vmem:[#allocation2 + $0x4] sm:$0xf]
    %211 = vst [vmem:[%s4] sm:$0xf] %v209
    %212 = vst [vmem:[%s4 + $0x8] sm:$0xf] %v210
    %v213 = vld [vmem:[#allocation3] sm:$0xf]
    %v214 = vld [vmem:[#allocation3 + $0x4] sm:$0xf]
    %215 = vst [vmem:[%s4 + $0x4] sm:$0xf] %v213
    %216 = vst [vmem:[%s4 + $0xc] sm:$0xf] %v214
    %v217 = vld [vmem:[#allocation4] sm:$0xf]
    %v218 = vld [vmem:[#allocation4 + $0x4] sm:$0xf]
    %219 = vst [vmem:[%s5] sm:$0xf] %v217
    %220 = vst [vmem:[%s5 + $0x8] sm:$0xf] %v218
    %v221 = vld [vmem:[#allocation5] sm:$0xf]
    %v222 = vld [vmem:[#allocation5 + $0x4] sm:$0xf]
    %223 = vst [vmem:[%s5 + $0x4] sm:$0xf] %v221
    %224 = vst [vmem:[%s5 + $0xc] sm:$0xf] %v222
    // Predicated region
    $region182: #{channel_shuffle.1} parent=1 // pred_check
      _
    $region183: #{channel_shuffle.1} parent=1 // pred_check_branch
      %226 = sbr.rel (0) target = $region185
    $region184: #{channel_shuffle.1} parent=1 // pred_region
      _
    $region185: #{channel_shuffle.1} parent=1 // pred_fallthru
      _
    // Predicated region
    $region186: #{channel_shuffle.1} parent=1 // pred_check
      _
    $region187: #{channel_shuffle.1} parent=1 // pred_check_branch
      %228 = sbr.rel (0) target = $region189
    $region188: #{channel_shuffle.1} parent=1 // pred_region
      _
    $region189: #{channel_shuffle.1} parent=1 // pred_fallthru
      _
    // Predicated region
    $region190: #{channel_shuffle.1} parent=1 // pred_check
      _
    $region191: #{channel_shuffle.1} parent=1 // pred_check_branch
      %230 = sbr.rel (0) target = $region193
    $region192: #{channel_shuffle.1} parent=1 // pred_region
      _
    $region193: #{channel_shuffle.1} parent=1 // pred_fallthru
      _
    // Predicated region
    $region194: #{channel_shuffle.1} parent=1 // pred_check
      _
    $region195: #{channel_shuffle.1} parent=1 // pred_check_branch
      %232 = sbr.rel (0) target = $region197
    $region196: #{channel_shuffle.1} parent=1 // pred_region
      _
    $region197: #{channel_shuffle.1} parent=1 // pred_fallthru
      _

</llo_original>
